<compile_context>
chip_gen: v7x
topology: tpu7x:2x2x1
jax: 0.10.0
libtpu: 0.0.40
codegen_flags: <defaults>
</compile_context>

<pallas_src>
import jax
import jax.numpy as jnp
import numpy as np
from jax import lax
from jax.experimental import pallas as pl
from jax.experimental.pallas import tpu as pltpu

_PW = 8                              # halo slab width (cols) each side of W in the scratch
_VMEM_LIMIT = 64 * 1024 * 1024


def _pick_tile(total, target):
    """Largest tile <= max(8, target) that divides `total`."""
    t = min(total, max(8, target))
    while total % t:
        t -= 1
    return t


# --------------------------------------------------------------------------------------
# Kernel 1: ConvTranspose2d(Cin -> Cin//2, kernel=2, stride=2) == one bf16 MXU matmul.
#   out[b, 2i+ky, 2j+kx, co] = bias[co] + sum_ci x[b, i, j, ci] * W[ci, co, ky, kx]
# x is fed as (B*H1, W1, Cin) row tiles; weight columns are ordered (ky, kx, co) so the
# kernel stores straight into an interleave-ready (rows, ky, W1, 2*Chalf) layout whose
# reshape to NHWC (B, 2H1, 2W1, Chalf) is contiguous (free).
# --------------------------------------------------------------------------------------
def _upconv_kernel(x_ref, w_ref, b_ref, o_ref):
    tr, w1, cin = x_ref.shape
    half = w_ref.shape[1] // 2                       # 2 * Chalf  -> (kx, co) columns
    x = x_ref[...].reshape(tr * w1, cin).astype(jnp.bfloat16)
    y = jnp.dot(x, w_ref[...], preferred_element_type=jnp.float32) + b_ref[...]
    o_ref[:, 0, :, :] = y[:, :half].reshape(tr, w1, half).astype(o_ref.dtype)   # ky = 0
    o_ref[:, 1, :, :] = y[:, half:].reshape(tr, w1, half).astype(o_ref.dtype)   # ky = 1


# --------------------------------------------------------------------------------------
# Kernel 2: fused concat + DoubleConv
#   concat[x2, up] -> conv3x3 -> BN -> LeakyReLU -> [dropout=id] -> conv3x3 -> BN -> LReLU
# One batch element per (parallel) grid step.  Each 3x3 conv is a single K=9*C bf16 matmul
# over an im2col patch matrix assembled from a zero-halo padded VMEM scratch:
#   * only the halo is zeroed, never the whole buffer
#   * the interior lives at column offset _PW=8 -> the big interior store is aligned
#   * BN (eval) + conv bias are pre-folded into per-channel scale / bias in the wrapper.
# --------------------------------------------------------------------------------------
def _doubleconv_kernel(x2_ref, up_ref, w1_ref, s1_ref, b1_ref,
                       w2_ref, s2_ref, b2_ref, o_ref, pad1, pad2):
    _, H, W, Ch = x2_ref.shape
    Cin = pad1.shape[-1]
    Cmid = w1_ref.shape[1]
    Cout = w2_ref.shape[1]

    def zero_halo(pad, C):
        zrow = jnp.zeros((W + 2 * _PW, C), jnp.bfloat16)
        pad[0, :, :] = zrow                            # conv row -1
        pad[H + 1, :, :] = zrow                        # conv row  H
        zcol = jnp.zeros((H + 2, 1, C), jnp.bfloat16)
        pad[:, _PW - 1:_PW, :] = zcol                  # conv col -1
        pad[:, _PW + W:_PW + W + 1, :] = zcol          # conv col  W

    def conv3x3(pad, w_ref):
        C = pad.shape[-1]
        base = pad[...]
        taps = [base[ky:ky + H, _PW - 1 + kx:_PW - 1 + kx + W, :]
                for ky in range(3) for kx in range(3)]
        patches = jnp.concatenate(taps, axis=-1).reshape(H * W, 9 * C)
        return jnp.dot(patches, w_ref[...], preferred_element_type=jnp.float32)

    # --- conv1: concat([x2, up], channel) assembled straight into the padded scratch ---
    zero_halo(pad1, Cin)
    pad1[1:H + 1, _PW:_PW + W, 0:Ch] = x2_ref[0].astype(jnp.bfloat16)
    pad1[1:H + 1, _PW:_PW + W, Ch:Cin] = up_ref[0]
    h = conv3x3(pad1, w1_ref) * s1_ref[...] + b1_ref[...]
    h = jnp.where(h >= 0, h, 0.01 * h)                 # LeakyReLU(0.01)
    # TODO(synk): nn.Dropout(p=0.2) is stochastic in train mode; eval-mode identity here.

    # --- conv2 ---
    zero_halo(pad2, Cmid)
    pad2[1:H + 1, _PW:_PW + W, :] = h.reshape(H, W, Cmid).astype(jnp.bfloat16)
    h2 = conv3x3(pad2, w2_ref) * s2_ref[...] + b2_ref[...]
    h2 = jnp.where(h2 >= 0, h2, 0.01 * h2)
    o_ref[0] = h2.reshape(H, W, Cout).astype(o_ref.dtype)


# --------------------------------------------------------------------------------------
# Wrapper: Up.forward (bilinear=False, deterministic=False branch), NHWC layout.
# --------------------------------------------------------------------------------------
def up_forward(x1, x2, params):
    B, H1, W1, Cin = x1.shape
    Chalf = Cin // 2
    eps = 1e-5

    # ---- self.up : ConvTranspose2d(Cin, Cin//2, k=2, s=2), M-tiled MXU matmul ----
    wt = params["wt"]                                   # (Cin, Chalf, 2, 2) torch layout
    w_mat = jnp.transpose(wt, (0, 2, 3, 1)).reshape(Cin, 4 * Chalf).astype(jnp.bfloat16)
    b_row = jnp.tile(params["bt"], 4).reshape(1, 4 * Chalf).astype(jnp.float32)
    x_rows = x1.reshape(B * H1, W1, Cin)

    TR = _pick_tile(B * H1, 1024 // max(W1, 1))
    y = pl.pallas_call(
        _upconv_kernel,
        out_shape=jax.ShapeDtypeStruct((B * H1, 2, W1, 2 * Chalf), jnp.bfloat16),
        grid=((B * H1) // TR,),
        in_specs=[pl.BlockSpec((TR, W1, Cin), lambda i: (i, 0, 0)),
                  pl.BlockSpec((Cin, 4 * Chalf), lambda i: (0, 0)),
                  pl.BlockSpec((1, 4 * Chalf), lambda i: (0, 0))],
        out_specs=pl.BlockSpec((TR, 2, W1, 2 * Chalf), lambda i: (i, 0, 0, 0)),
        compiler_params=pltpu.CompilerParams(
            dimension_semantics=("parallel",),
            vmem_limit_bytes=_VMEM_LIMIT),
    )(x_rows, w_mat, b_row)

    # free contiguous reshape -> NHWC upsampled tensor (no transpose / HBM round trip)
    up = y.reshape(B, 2 * H1, 2 * W1, Chalf)

    # F.pad to x2's spatial size (no-op for standard power-of-2 U-Nets)
    diffY = x2.shape[1] - up.shape[1]
    diffX = x2.shape[2] - up.shape[2]
    if diffY or diffX:
        # TODO(synk): torch F.pad also crops for negative diffs; only padding handled here.
        up = jnp.pad(up, ((0, 0), (diffY // 2, diffY - diffY // 2),
                          (diffX // 2, diffX - diffX // 2), (0, 0)))

    # ---- self.conv : DoubleConv(Cin -> Cin//2), concat fused in-kernel, BN folded ----
    Cmid = params["w1"].shape[0]
    Cout = params["w2"].shape[0]
    w1 = jnp.transpose(params["w1"], (2, 3, 1, 0)).reshape(9 * Cin, Cmid).astype(jnp.bfloat16)
    w2 = jnp.transpose(params["w2"], (2, 3, 1, 0)).reshape(9 * Cmid, Cout).astype(jnp.bfloat16)
    scale1 = params["g1"] * lax.rsqrt(params["v1"] + eps)
    bias1 = scale1 * (params["bc1"] - params["m1"]) + params["be1"]
    scale2 = params["g2"] * lax.rsqrt(params["v2"] + eps)
    bias2 = scale2 * (params["bc2"] - params["m2"]) + params["be2"]

    Bc, H, W, _ = x2.shape
    out = pl.pallas_call(
        _doubleconv_kernel,
        out_shape=jax.ShapeDtypeStruct((Bc, H, W, Cout), jnp.float32),
        grid=(Bc,),
        in_specs=[
            pl.BlockSpec((1, H, W, Chalf), lambda b: (b, 0, 0, 0)),   # x2 (first Chalf ch.)
            pl.BlockSpec((1, H, W, Chalf), lambda b: (b, 0, 0, 0)),   # up (last Chalf ch.)
            pl.BlockSpec((9 * Cin, Cmid), lambda b: (0, 0)),          # conv1 weight (im2col K)
            pl.BlockSpec((1, Cmid), lambda b: (0, 0)),                # folded BN1 scale
            pl.BlockSpec((1, Cmid), lambda b: (0, 0)),                # folded BN1 bias
            pl.BlockSpec((9 * Cmid, Cout), lambda b: (0, 0)),         # conv2 weight
            pl.BlockSpec((1, Cout), lambda b: (0, 0)),                # folded BN2 scale
            pl.BlockSpec((1, Cout), lambda b: (0, 0)),                # folded BN2 bias
        ],
        out_specs=pl.BlockSpec((1, H, W, Cout), lambda b: (b, 0, 0, 0)),
        scratch_shapes=[pltpu.VMEM((H + 2, W + 2 * _PW, Cin), jnp.bfloat16),
                        pltpu.VMEM((H + 2, W + 2 * _PW, Cmid), jnp.bfloat16)],
        compiler_params=pltpu.CompilerParams(
            dimension_semantics=("parallel",),
            vmem_limit_bytes=_VMEM_LIMIT),
    )(x2, up, w1,
      scale1.reshape(1, Cmid).astype(jnp.float32),
      bias1.reshape(1, Cmid).astype(jnp.float32),
      w2,
      scale2.reshape(1, Cout).astype(jnp.float32),
      bias2.reshape(1, Cout).astype(jnp.float32))
    return out


# --------------------------------------------------------------------------------------
# Pure-JAX f32 reference (same math, XLA convs) for a correctness check.
# --------------------------------------------------------------------------------------
def ref_forward(x1, x2, params):
    B, H1, W1, Cin = x1.shape
    Chalf = Cin // 2
    eps = 1e-5

    wt = jnp.transpose(params["wt"], (0, 2, 3, 1))     # (Cin, ky, kx, Chalf)
    up = jnp.einsum("bijc,ckxo->bikjxo", x1, wt, precision=lax.Precision.HIGHEST)
    up = up.reshape(B, 2 * H1, 2 * W1, Chalf) + params["bt"]
    diffY = x2.shape[1] - up.shape[1]
    diffX = x2.shape[2] - up.shape[2]
    up = jnp.pad(up, ((0, 0), (diffY // 2, diffY - diffY // 2),
                      (diffX // 2, diffX - diffX // 2), (0, 0)))
    x = jnp.concatenate([x2, up], axis=-1)

    def conv_bn_lrelu(x, w_oihw, bconv, g, be, m, v):
        w = jnp.transpose(w_oihw, (2, 3, 1, 0))
        y = lax.conv_general_dilated(
            x, w, (1, 1), "SAME",
            dimension_numbers=("NHWC", "HWIO", "NHWC"),
            precision=lax.Precision.HIGHEST) + bconv
        y = g * (y - m) * lax.rsqrt(v + eps) + be
        return jnp.where(y >= 0, y, 0.01 * y)

    h = conv_bn_lrelu(x, params["w1"], params["bc1"], params["g1"],
                      params["be1"], params["m1"], params["v1"])
    h = conv_bn_lrelu(h, params["w2"], params["bc2"], params["g2"],
                      params["be2"], params["m2"], params["v2"])
    return h


if __name__ == "__main__":
    key = jax.random.PRNGKey(0)
    ks = jax.random.split(key, 16)

    # Up(in_channels=8, out_channels=4), non-bilinear branch -> conv out = Cin//2
    B, Cin, H1, W1 = 2, 8, 8, 8
    Chalf = Cin // 2
    Cmid = Chalf
    Cout = Chalf
    H2, W2 = 2 * H1, 2 * W1

    # NHWC inputs (torch NCHW equivalents: x1=(2,8,8,8), x2=(2,4,16,16))
    x1 = jax.random.normal(ks[0], (B, H1, W1, Cin), jnp.float32)
    x2 = jax.random.normal(ks[1], (B, H2, W2, Chalf), jnp.float32)

    params = dict(
        # ConvTranspose2d weight (in, out, kH, kW), bias
        wt=0.2 * jax.random.normal(ks[2], (Cin, Chalf, 2, 2), jnp.float32),
        bt=0.1 * jax.random.normal(ks[3], (Chalf,), jnp.float32),
        # Conv1 (OIHW), BN1 (gamma, beta, running_mean, running_var)
        w1=0.2 * jax.random.normal(ks[4], (Cmid, Cin, 3, 3), jnp.float32),
        bc1=0.1 * jax.random.normal(ks[5], (Cmid,), jnp.float32),
        g1=1.0 + 0.1 * jax.random.normal(ks[6], (Cmid,), jnp.float32),
        be1=0.1 * jax.random.normal(ks[7], (Cmid,), jnp.float32),
        m1=0.1 * jax.random.normal(ks[8], (Cmid,), jnp.float32),
        v1=jax.random.uniform(ks[9], (Cmid,), jnp.float32, 0.5, 1.5),
        # Conv2 (OIHW), BN2
        w2=0.2 * jax.random.normal(ks[10], (Cout, Cmid, 3, 3), jnp.float32),
        bc2=0.1 * jax.random.normal(ks[11], (Cout,), jnp.float32),
        g2=1.0 + 0.1 * jax.random.normal(ks[12], (Cout,), jnp.float32),
        be2=0.1 * jax.random.normal(ks[13], (Cout,), jnp.float32),
        m2=0.1 * jax.random.normal(ks[14], (Cout,), jnp.float32),
        v2=jax.random.uniform(ks[15], (Cout,), jnp.float32, 0.5, 1.5),
    )

    out = jax.block_until_ready(up_forward(x1, x2, params))
    ref = jax.block_until_ready(ref_forward(x1, x2, params))
    assert out.shape == (B, H2, W2, Cout), out.shape
    # kernels use bf16 MXU operands (f32 accumulate) per perf review; reference is f32
    np.testing.assert_allclose(np.asarray(out), np.asarray(ref), rtol=3e-2, atol=3e-2)
    print("KERNEL_OK")
</pallas_src>

<mosaic_0001>
module attributes {stable_mosaic.version = 11 : i64} {
  func.func @_upconv_kernel(%arg0: i32, %arg1: memref<16x8x8xf32, #tpu.memory_space<vmem>>, %arg2: memref<8x16xbf16, #tpu.memory_space<vmem>>, %arg3: memref<1x16xf32, #tpu.memory_space<vmem>>, %arg4: memref<16x2x8x8xbf16, #tpu.memory_space<vmem>>) attributes {dimension_semantics = [#tpu.dimension_semantics<parallel>], iteration_bounds = array<i64: 1>, scalar_prefetch = 0 : i64, scratch_operands = 0 : i64, tpu.core_type = #tpu.core_type<tc>, window_params = [{transform_indices = @transform_0, window_bounds = array<i64: 16, 8, 8>}, {pipeline_mode = #tpu.pipeline_mode<synchronous>, transform_indices = @transform_1, window_bounds = array<i64: 8, 16>}, {pipeline_mode = #tpu.pipeline_mode<synchronous>, transform_indices = @transform_2, window_bounds = array<i64: 1, 16>}, {transform_indices = @transform_3, window_bounds = array<i64: 16, 2, 8, 8>}]} {
    %c0 = arith.constant 0 : index
    %c0_0 = arith.constant 0 : index
    %c0_1 = arith.constant 0 : index
    %0 = vector.load %arg1[%c0, %c0_0, %c0_1] : memref<16x8x8xf32, #tpu.memory_space<vmem>>, vector<16x8x8xf32>
    %1 = vector.shape_cast %0 : vector<16x8x8xf32> to vector<128x8xf32>
    %2 = arith.truncf %1 : vector<128x8xf32> to vector<128x8xbf16>
    %c0_2 = arith.constant 0 : index
    %c0_3 = arith.constant 0 : index
    %3 = vector.load %arg2[%c0_2, %c0_3] : memref<8x16xbf16, #tpu.memory_space<vmem>>, vector<8x16xbf16>
    %cst = arith.constant dense<0.000000e+00> : vector<128x16xf32>
    %4 = tpu.matmul %2, %3, %cst {dimension_numbers = #tpu.dot_dimension_numbers<[1], [0], [0], [1], [0, 0, 1, 1], [], []>} : vector<128x8xbf16>, vector<8x16xbf16>, vector<128x16xf32> -> vector<128x16xf32>
    %c0_4 = arith.constant 0 : index
    %c0_5 = arith.constant 0 : index
    %5 = vector.load %arg3[%c0_4, %c0_5] : memref<1x16xf32, #tpu.memory_space<vmem>>, vector<1x16xf32>
    %6 = vector.broadcast %5 : vector<1x16xf32> to vector<128x16xf32>
    %7 = arith.addf %4, %6 : vector<128x16xf32>
    %8 = vector.extract_strided_slice %7 {offsets = [0, 0], sizes = [128, 8], strides = [1, 1]} : vector<128x16xf32> to vector<128x8xf32>
    %9 = vector.shape_cast %8 : vector<128x8xf32> to vector<16x8x8xf32>
    %10 = arith.truncf %9 : vector<16x8x8xf32> to vector<16x8x8xbf16>
    %c0_6 = arith.constant 0 : index
    %c0_7 = arith.constant 0 : index
    %c0_8 = arith.constant 0 : index
    %c0_9 = arith.constant 0 : index
    %11 = vector.load %arg4[%c0_6, %c0_7, %c0_8, %c0_9] : memref<16x2x8x8xbf16, #tpu.memory_space<vmem>>, vector<16x1x8x8xbf16>
    %12 = vector.shape_cast %11 : vector<16x1x8x8xbf16> to vector<16x8x8xbf16>
    %13 = vector.shape_cast %10 : vector<16x8x8xbf16> to vector<16x1x8x8xbf16>
    tpu.vector_store %arg4[%c0_6, %c0_7, %c0_8, %c0_9], %13 {strides = array<i32>} : memref<16x2x8x8xbf16, #tpu.memory_space<vmem>>, vector<16x1x8x8xbf16>,
    %14 = vector.extract_strided_slice %7 {offsets = [0, 8], sizes = [128, 8], strides = [1, 1]} : vector<128x16xf32> to vector<128x8xf32>
    %15 = vector.shape_cast %14 : vector<128x8xf32> to vector<16x8x8xf32>
    %16 = arith.truncf %15 : vector<16x8x8xf32> to vector<16x8x8xbf16>
    %c0_10 = arith.constant 0 : index
    %c1 = arith.constant 1 : index
    %c0_11 = arith.constant 0 : index
    %c0_12 = arith.constant 0 : index
    %17 = vector.load %arg4[%c0_10, %c1, %c0_11, %c0_12] : memref<16x2x8x8xbf16, #tpu.memory_space<vmem>>, vector<16x1x8x8xbf16>
    %18 = vector.shape_cast %17 : vector<16x1x8x8xbf16> to vector<16x8x8xbf16>
    %19 = vector.shape_cast %16 : vector<16x8x8xbf16> to vector<16x1x8x8xbf16>
    tpu.vector_store %arg4[%c0_10, %c1, %c0_11, %c0_12], %19 {strides = array<i32>} : memref<16x2x8x8xbf16, #tpu.memory_space<vmem>>, vector<16x1x8x8xbf16>,
    return
  }
  func.func @transform_0(%arg0: i32) -> (i32, i32, i32) {
    %c0_i32 = arith.constant 0 : i32
    %c0_i32_0 = arith.constant 0 : i32
    %c0_i32_1 = arith.constant 0 : i32
    return %arg0, %c0_i32, %c0_i32_0 : i32, i32, i32
  }
  func.func @transform_1(%arg0: i32) -> (i32, i32) {
    %c0_i32 = arith.constant 0 : i32
    %c0_i32_0 = arith.constant 0 : i32
    %c0_i32_1 = arith.constant 0 : i32
    return %c0_i32, %c0_i32_0 : i32, i32
  }
  func.func @transform_2(%arg0: i32) -> (i32, i32) {
    %c0_i32 = arith.constant 0 : i32
    %c0_i32_0 = arith.constant 0 : i32
    %c0_i32_1 = arith.constant 0 : i32
    return %c0_i32, %c0_i32_0 : i32, i32
  }
  func.func @transform_3(%arg0: i32) -> (i32, i32, i32, i32) {
    %c0_i32 = arith.constant 0 : i32
    %c0_i32_0 = arith.constant 0 : i32
    %c0_i32_1 = arith.constant 0 : i32
    %c0_i32_2 = arith.constant 0 : i32
    return %arg0, %c0_i32, %c0_i32_0, %c0_i32_1 : i32, i32, i32, i32
  }
}

</mosaic_0001>

<llo_original>
// kernel: tpu_custom_call.1
$region0: #{tpu_custom_call.1}
  #allocation0 [shape = 'u32[]', space=smem, size = 0x4, offset = 0x4, fixed_abs, tag = 'smem constant byte address 0x4 - core index']
  #allocation1 [shape = 'u32[144,128]{1,0:T(1,128)}', space=vmem, size = 0x12000, scoped, tag = 'internal scratch']
  %s0 = inlined_call_operand.hbm [shape: f32[16,8,8], index: 0, kind: input, shape index: {}]
  %s1 = inlined_call_operand.hbm [shape: bf16[8,16], index: 1, kind: input, shape index: {}]
  %s2 = inlined_call_operand.hbm [shape: f32[1,16], index: 2, kind: input, shape index: {}]
  %s3 = inlined_call_operand.hbm [shape: bf16[16,2,8,8], index: 3, kind: output, shape index: {}]
  %s4 = sld [smem:[#allocation0]]
  $region34: #{tpu_custom_call.1} parent=0
    _
  %s6 = ssub.s32 1, %s4
  %s7 = scalar_select 0, %s6, %s4
  $region1: #{tpu_custom_call.1} parent=0
    #allocation2 [shape = 'u8[65536]{0}', space=vmem, size = 0x10000, scoped, tag = 'input window, operand 0, single buffered']
    #allocation3 [shape = 's32[1]{0}', space=sflag, size = 0x4, scoped, tag = 'scoped memory for tpu_custom_call.1']
    #allocation4 [shape = 's32[1]{0}', space=sflag, size = 0x4, scoped, tag = 'scoped memory for tpu_custom_call.1']
    #allocation5 [shape = 'u8[2048]{0}', space=vmem, size = 0x800, scoped, tag = 'input window, operand 1, single buffered']
    #allocation6 [shape = 's32[1]{0}', space=sflag, size = 0x4, scoped, tag = 'scoped memory for tpu_custom_call.1']
    #allocation7 [shape = 'u8[512]{0}', space=vmem, size = 0x400, scoped, tag = 'input window, operand 2, single buffered']
    #allocation8 [shape = 'u8[65536]{0}', space=vmem, size = 0x10000, scoped, tag = 'output window, operand 0, single buffered']
    %8 = vsyncpa [#allocation3], 0
    %9 = vsyncpa [#allocation6], 0
    %10 = vsyncpa [#allocation4], 0
    // Predicated region
    $region2: #{tpu_custom_call.1} parent=1 // pred_check
      _
    $region3: #{tpu_custom_call.1} parent=1 // pred_check_branch
      %12 = sbr.rel (0) target = $region5
    $region4: #{tpu_custom_call.1} parent=1 // pred_region
      %s14 = ssub.s32 2048, 2048
      %15 = vsyncadd [#allocation3], %s14
      %s16 = sshll.u32 [#allocation2], 4
      %s17 = int_to_ptr.vmem [resolvable:$true] %s16
      %22 = dma.hbm_to_vmem [thread:$0]  %s0, 2048, %s17, [#allocation3], 128, 128, 8
    $region5: #{tpu_custom_call.1} parent=1 // pred_fallthru
      _
    // Predicated region
    $region6: #{tpu_custom_call.1} parent=1 // pred_check
      _
    $region7: #{tpu_custom_call.1} parent=1 // pred_check_branch
      %24 = sbr.rel (0) target = $region9
    $region8: #{tpu_custom_call.1} parent=1 // pred_region
      %s26 = ssub.s32 64, 64
      %27 = vsyncadd [#allocation6], %s26
      %s29 = sshll.u32 [#allocation5], 4
      %s30 = int_to_ptr.vmem [resolvable:$true] %s29
      %32 = dma.hbm_to_vmem [thread:$0]  %s1, 64, %s30, [#allocation6]
    $region9: #{tpu_custom_call.1} parent=1 // pred_fallthru
      _
    // Predicated region
    $region10: #{tpu_custom_call.1} parent=1 // pred_check
      _
    $region11: #{tpu_custom_call.1} parent=1 // pred_check_branch
      %34 = sbr.rel (0) target = $region13
    $region12: #{tpu_custom_call.1} parent=1 // pred_region
      %s36 = ssub.s32 16, 16
      %37 = vsyncadd [#allocation6], %s36
      %s39 = sshll.u32 [#allocation7], 4
      %s40 = int_to_ptr.vmem [resolvable:$true] %s39
      %42 = dma.hbm_to_vmem [thread:$0]  %s2, 16, %s40, [#allocation6]
    $region13: #{tpu_custom_call.1} parent=1 // pred_fallthru
      _
    // Predicated region
    $region14: #{tpu_custom_call.1} parent=1 // pred_check
      _
    $region15: #{tpu_custom_call.1} parent=1 // pred_check_branch
      %44 = sbr.rel (0) target = $region17
    $region16: #{tpu_custom_call.1} parent=1 // pred_region
      %45 = dma.done [#allocation3], 2048
    $region17: #{tpu_custom_call.1} parent=1 // pred_fallthru
      _
    // Predicated region
    $region18: #{tpu_custom_call.1} parent=1 // pred_check
      _
    $region19: #{tpu_custom_call.1} parent=1 // pred_check_branch
      %47 = sbr.rel (0) target = $region21
    $region20: #{tpu_custom_call.1} parent=1 // pred_region
      %48 = dma.done [#allocation6], 64
    $region21: #{tpu_custom_call.1} parent=1 // pred_fallthru
      _
    // Predicated region
    $region22: #{tpu_custom_call.1} parent=1 // pred_check
      _
    $region23: #{tpu_custom_call.1} parent=1 // pred_check_branch
      %50 = sbr.rel (0) target = $region25
    $region24: #{tpu_custom_call.1} parent=1 // pred_region
      %51 = dma.done [#allocation6], 16
    $region25: #{tpu_custom_call.1} parent=1 // pred_fallthru
      _
    %v53 = vld [vmem:[#allocation2] sm:$0xff]
    %v54 = vld [vmem:[#allocation2 + $0x8] sm:$0xff]
    %v55 = vld [vmem:[#allocation2 + $0x10] sm:$0xff]
    %v56 = vld [vmem:[#allocation2 + $0x18] sm:$0xff]
    %v57 = vld [vmem:[#allocation2 + $0x20] sm:$0xff]
    %v58 = vld [vmem:[#allocation2 + $0x28] sm:$0xff]
    %v59 = vld [vmem:[#allocation2 + $0x30] sm:$0xff]
    %v60 = vld [vmem:[#allocation2 + $0x38] sm:$0xff]
    %v61 = vld [vmem:[#allocation2 + $0x40] sm:$0xff]
    %v62 = vld [vmem:[#allocation2 + $0x48] sm:$0xff]
    %v63 = vld [vmem:[#allocation2 + $0x50] sm:$0xff]
    %v64 = vld [vmem:[#allocation2 + $0x58] sm:$0xff]
    %v65 = vld [vmem:[#allocation2 + $0x60] sm:$0xff]
    %v66 = vld [vmem:[#allocation2 + $0x68] sm:$0xff]
    %v67 = vld [vmem:[#allocation2 + $0x70] sm:$0xff]
    %v68 = vld [vmem:[#allocation2 + $0x78] sm:$0xff]
    %v69 = vpack.c.bf16 %v54, %v53
    %v70 = vpack.c.bf16 %v56, %v55
    %v71 = vpack.c.bf16 %v58, %v57
    %v72 = vpack.c.bf16 %v60, %v59
    %v73 = vpack.c.bf16 %v62, %v61
    %v74 = vpack.c.bf16 %v64, %v63
    %v75 = vpack.c.bf16 %v66, %v65
    %v76 = vpack.c.bf16 %v68, %v67
    %v77 = vld [vmem:[#allocation5] sm:$0xf]
    %v78 = vld [vmem:[#allocation7] sm:$0x1]
    %v80 = vlaneseq
    %v81 = vshrl.u32 %v80, 7
    %v82 = vsub.s32 0, %v81
    %v83 = vrot.slane %v78, %v82
    %vm85 = vcmask 64512
    %v87 = vsel %vm85, %v69, 0
    %v90 = vsel %vm85, %v70, 0
    %v93 = vsel %vm85, %v71, 0
    %v96 = vsel %vm85, %v72, 0
    %v99 = vsel %vm85, %v73, 0
    %v102 = vsel %vm85, %v74, 0
    %v105 = vsel %vm85, %v75, 0
    %v108 = vsel %vm85, %v76, 0
    %vm110 = vcmask 1043456
    %v112 = vsel %vm110, %v77, 0
    %114 = vmatprep.subr.bf16.mxu0 0
    %115 = vmatpush1.bf16.msra.mxu0 %v112
    %116 = vmatprep.subr.bf16.mxu0 0
    %117 = vmatpush1.bf16.msra.mxu0 0
    %118 = vmatprep.subr.bf16.mxu0 0
    %119 = vmatpush1.bf16.msra.mxu0 0
    %120 = vmatprep.subr.bf16.mxu0 0
    %121 = vmatpush1.bf16.msra.mxu0 0
    %122 = vmatprep.subr.bf16.mxu0 0
    %123 = vmatpush1.bf16.msra.mxu0 0
    %124 = vmatprep.subr.bf16.mxu0 0
    %125 = vmatpush1.bf16.msra.mxu0 0
    %126 = vmatprep.subr.bf16.mxu0 0
    %127 = vmatpush1.bf16.msra.mxu0 0
    %128 = vmatprep.subr.bf16.mxu0 0
    %129 = vmatpush1.bf16.msra.mxu0 0
    %130 = vmatprep.subr.bf16.mxu0 0
    %131 = vmatpush1.bf16.msra.mxu0 0
    %132 = vmatprep.subr.bf16.mxu0 0
    %133 = vmatpush1.bf16.msra.mxu0 0
    %134 = vmatprep.subr.bf16.mxu0 0
    %135 = vmatpush1.bf16.msra.mxu0 0
    %136 = vmatprep.subr.bf16.mxu0 0
    %137 = vmatpush1.bf16.msra.mxu0 0
    %138 = vmatprep.subr.bf16.mxu0 0
    %139 = vmatpush1.bf16.msra.mxu0 0
    %140 = vmatprep.subr.bf16.mxu0 0
    %141 = vmatpush1.bf16.msra.mxu0 0
    %142 = vmatprep.subr.bf16.mxu0 0
    %143 = vmatpush1.bf16.msra.mxu0 0
    %144 = vmatprep.subr.bf16.mxu0 0
    %145 = vmatpush1.bf16.msra.mxu0 0
    %146 = vmatprep.mubr.bf16.mxu0 0
    %147 = vmatmul.mubr.bf16.gmra.mrb[0].mxu0 %v87
    %v148 = vpop.f32.mrb[0].mxu0
    %v149 = vadd.f32 %v83, %v148
    %v150 = vpop.f32.mrb[0].mxu0
    %v151 = vpop.f32.mrb[0].mxu0
    %v152 = vadd.f32 %v83, %v151
    %v153 = vpop.f32.mrb[0].mxu0
    %154 = vmatprep.mubr.bf16.mxu0 0
    %155 = vmatmul.mubr.bf16.gmra.mrb[0].mxu0 %v90
    %v156 = vpop.f32.mrb[0].mxu0
    %v157 = vadd.f32 %v83, %v156
    %v158 = vpop.f32.mrb[0].mxu0
    %v159 = vpop.f32.mrb[0].mxu0
    %v160 = vadd.f32 %v83, %v159
    %v161 = vpop.f32.mrb[0].mxu0
    %162 = vmatprep.mubr.bf16.mxu0 0
    %163 = vmatmul.mubr.bf16.gmra.mrb[0].mxu0 %v93
    %v164 = vpop.f32.mrb[0].mxu0
    %v165 = vadd.f32 %v83, %v164
    %v166 = vpop.f32.mrb[0].mxu0
    %v167 = vpop.f32.mrb[0].mxu0
    %v168 = vadd.f32 %v83, %v167
    %v169 = vpop.f32.mrb[0].mxu0
    %170 = vmatprep.mubr.bf16.mxu0 0
    %171 = vmatmul.mubr.bf16.gmra.mrb[0].mxu0 %v96
    %v172 = vpop.f32.mrb[0].mxu0
    %v173 = vadd.f32 %v83, %v172
    %v174 = vpop.f32.mrb[0].mxu0
    %v175 = vpop.f32.mrb[0].mxu0
    %v176 = vadd.f32 %v83, %v175
    %v177 = vpop.f32.mrb[0].mxu0
    %178 = vmatprep.mubr.bf16.mxu0 0
    %179 = vmatmul.mubr.bf16.gmra.mrb[0].mxu0 %v99
    %v180 = vpop.f32.mrb[0].mxu0
    %v181 = vadd.f32 %v83, %v180
    %v182 = vpop.f32.mrb[0].mxu0
    %v183 = vpop.f32.mrb[0].mxu0
    %v184 = vadd.f32 %v83, %v183
    %v185 = vpop.f32.mrb[0].mxu0
    %186 = vmatprep.mubr.bf16.mxu0 0
    %187 = vmatmul.mubr.bf16.gmra.mrb[0].mxu0 %v102
    %v188 = vpop.f32.mrb[0].mxu0
    %v189 = vadd.f32 %v83, %v188
    %v190 = vpop.f32.mrb[0].mxu0
    %v191 = vpop.f32.mrb[0].mxu0
    %v192 = vadd.f32 %v83, %v191
    %v193 = vpop.f32.mrb[0].mxu0
    %194 = vmatprep.mubr.bf16.mxu0 0
    %195 = vmatmul.mubr.bf16.gmra.mrb[0].mxu0 %v105
    %v196 = vpop.f32.mrb[0].mxu0
    %v197 = vadd.f32 %v83, %v196
    %v198 = vpop.f32.mrb[0].mxu0
    %v199 = vpop.f32.mrb[0].mxu0
    %v200 = vadd.f32 %v83, %v199
    %v201 = vpop.f32.mrb[0].mxu0
    %202 = vmatprep.mubr.bf16.mxu0 0
    %203 = vmatmul.mubr.bf16.gmra.mrb[0].mxu0 %v108
    %v204 = vpop.f32.mrb[0].mxu0
    %v205 = vadd.f32 %v83, %v204
    %v206 = vpop.f32.mrb[0].mxu0
    %v207 = vpop.f32.mrb[0].mxu0
    %v208 = vadd.f32 %v83, %v207
    %v209 = vpop.f32.mrb[0].mxu0
    %210 = vdwg.mxu0
    %v211 = vpack.c.bf16 %v149, %v149
    %v212 = vpack.c.bf16 %v152, %v152
    %v213 = vpack.c.bf16 %v157, %v157
    %v214 = vpack.c.bf16 %v160, %v160
    %v215 = vpack.c.bf16 %v165, %v165
    %v216 = vpack.c.bf16 %v168, %v168
    %v217 = vpack.c.bf16 %v173, %v173
    %v218 = vpack.c.bf16 %v176, %v176
    %v219 = vpack.c.bf16 %v181, %v181
    %v220 = vpack.c.bf16 %v184, %v184
    %v221 = vpack.c.bf16 %v189, %v189
    %v222 = vpack.c.bf16 %v192, %v192
    %v223 = vpack.c.bf16 %v197, %v197
    %v224 = vpack.c.bf16 %v200, %v200
    %v225 = vpack.c.bf16 %v205, %v205
    %v226 = vpack.c.bf16 %v208, %v208
    %vm227 = vcmask 60416
    %228 = vst.msk [vmem:[#allocation8] sm:$0xf] %vm227, %v211
    %229 = vst.msk [vmem:[#allocation8 + $0x8] sm:$0xf] %vm227, %v212
    %230 = vst.msk [vmem:[#allocation8 + $0x10] sm:$0xf] %vm227, %v213
    %231 = vst.msk [vmem:[#allocation8 + $0x18] sm:$0xf] %vm227, %v214
    %232 = vst.msk [vmem:[#allocation8 + $0x20] sm:$0xf] %vm227, %v215
    %233 = vst.msk [vmem:[#allocation8 + $0x28] sm:$0xf] %vm227, %v216
    %234 = vst.msk [vmem:[#allocation8 + $0x30] sm:$0xf] %vm227, %v217
    %235 = vst.msk [vmem:[#allocation8 + $0x38] sm:$0xf] %vm227, %v218
    %236 = vst.msk [vmem:[#allocation8 + $0x40] sm:$0xf] %vm227, %v219
    %237 = vst.msk [vmem:[#allocation8 + $0x48] sm:$0xf] %vm227, %v220
    %238 = vst.msk [vmem:[#allocation8 + $0x50] sm:$0xf] %vm227, %v221
    %239 = vst.msk [vmem:[#allocation8 + $0x58] sm:$0xf] %vm227, %v222
    %240 = vst.msk [vmem:[#allocation8 + $0x60] sm:$0xf] %vm227, %v223
    %241 = vst.msk [vmem:[#allocation8 + $0x68] sm:$0xf] %vm227, %v224
    %242 = vst.msk [vmem:[#allocation8 + $0x70] sm:$0xf] %vm227, %v225
    %243 = vst.msk [vmem:[#allocation8 + $0x78] sm:$0xf] %vm227, %v226
    %v260 = vunpack.c.l.b16 %v211
    %v261 = vunpack.c.l.b16 %v212
    %v262 = vunpack.c.l.b16 %v213
    %v263 = vunpack.c.l.b16 %v214
    %v264 = vunpack.c.l.b16 %v215
    %v265 = vunpack.c.l.b16 %v216
    %v266 = vunpack.c.l.b16 %v217
    %v267 = vunpack.c.l.b16 %v218
    %v268 = vunpack.c.l.b16 %v219
    %v269 = vunpack.c.l.b16 %v220
    %v270 = vunpack.c.l.b16 %v221
    %v271 = vunpack.c.l.b16 %v222
    %v272 = vunpack.c.l.b16 %v223
    %v273 = vunpack.c.l.b16 %v224
    %v274 = vunpack.c.l.b16 %v225
    %v275 = vunpack.c.l.b16 %v226
    %v276 = vpack.c.b16 %v260, %v260
    %v277 = vpack.c.b16 %v261, %v261
    %v278 = vpack.c.b16 %v262, %v262
    %v279 = vpack.c.b16 %v263, %v263
    %v280 = vpack.c.b16 %v264, %v264
    %v281 = vpack.c.b16 %v265, %v265
    %v282 = vpack.c.b16 %v266, %v266
    %v283 = vpack.c.b16 %v267, %v267
    %v284 = vpack.c.b16 %v268, %v268
    %v285 = vpack.c.b16 %v269, %v269
    %v286 = vpack.c.b16 %v270, %v270
    %v287 = vpack.c.b16 %v271, %v271
    %v288 = vpack.c.b16 %v272, %v272
    %v289 = vpack.c.b16 %v273, %v273
    %v290 = vpack.c.b16 %v274, %v274
    %v291 = vpack.c.b16 %v275, %v275
    %292 = vrot.lane.b32.xlu0 %v276, 120
    %v293 = vpop.permute.xlu0 %292
    %294 = vrot.lane.b32.xlu0 %v277, 120
    %v295 = vpop.permute.xlu0 %294
    %296 = vrot.lane.b32.xlu0 %v278, 120
    %v297 = vpop.permute.xlu0 %296
    %298 = vrot.lane.b32.xlu0 %v279, 120
    %v299 = vpop.permute.xlu0 %298
    %300 = vrot.lane.b32.xlu0 %v280, 120
    %v301 = vpop.permute.xlu0 %300
    %302 = vrot.lane.b32.xlu0 %v281, 120
    %v303 = vpop.permute.xlu0 %302
    %304 = vrot.lane.b32.xlu0 %v282, 120
    %v305 = vpop.permute.xlu0 %304
    %306 = vrot.lane.b32.xlu0 %v283, 120
    %v307 = vpop.permute.xlu0 %306
    %308 = vrot.lane.b32.xlu0 %v284, 120
    %v309 = vpop.permute.xlu0 %308
    %310 = vrot.lane.b32.xlu0 %v285, 120
    %v311 = vpop.permute.xlu0 %310
    %312 = vrot.lane.b32.xlu0 %v286, 120
    %v313 = vpop.permute.xlu0 %312
    %314 = vrot.lane.b32.xlu0 %v287, 120
    %v315 = vpop.permute.xlu0 %314
    %316 = vrot.lane.b32.xlu0 %v288, 120
    %v317 = vpop.permute.xlu0 %316
    %318 = vrot.lane.b32.xlu0 %v289, 120
    %v319 = vpop.permute.xlu0 %318
    %320 = vrot.lane.b32.xlu0 %v290, 120
    %v321 = vpop.permute.xlu0 %320
    %322 = vrot.lane.b32.xlu0 %v291, 120
    %v323 = vpop.permute.xlu0 %322
    %s340 = scalar_lea.vmem [#allocation8], 4
    %341 = vst.msk [vmem:[%s340] sm:$0xf] %vm227, %v293
    %342 = vst.msk [vmem:[%s340 + $0x8] sm:$0xf] %vm227, %v295
    %343 = vst.msk [vmem:[%s340 + $0x10] sm:$0xf] %vm227, %v297
    %344 = vst.msk [vmem:[%s340 + $0x18] sm:$0xf] %vm227, %v299
    %345 = vst.msk [vmem:[%s340 + $0x20] sm:$0xf] %vm227, %v301
    %346 = vst.msk [vmem:[%s340 + $0x28] sm:$0xf] %vm227, %v303
    %347 = vst.msk [vmem:[%s340 + $0x30] sm:$0xf] %vm227, %v305
    %348 = vst.msk [vmem:[%s340 + $0x38] sm:$0xf] %vm227, %v307
    %349 = vst.msk [vmem:[%s340 + $0x40] sm:$0xf] %vm227, %v309
    %350 = vst.msk [vmem:[%s340 + $0x48] sm:$0xf] %vm227, %v311
    %351 = vst.msk [vmem:[%s340 + $0x50] sm:$0xf] %vm227, %v313
    %352 = vst.msk [vmem:[%s340 + $0x58] sm:$0xf] %vm227, %v315
    %353 = vst.msk [vmem:[%s340 + $0x60] sm:$0xf] %vm227, %v317
    %354 = vst.msk [vmem:[%s340 + $0x68] sm:$0xf] %vm227, %v319
    %355 = vst.msk [vmem:[%s340 + $0x70] sm:$0xf] %vm227, %v321
    %356 = vst.msk [vmem:[%s340 + $0x78] sm:$0xf] %vm227, %v323
    // Predicated region
    $region26: #{tpu_custom_call.1} parent=1 // pred_check
      _
    $region27: #{tpu_custom_call.1} parent=1 // pred_check_branch
      %358 = sbr.rel (0) target = $region29
    $region28: #{tpu_custom_call.1} parent=1 // pred_region
      %s360 = ssub.s32 2048, 2048
      %361 = vsyncadd [#allocation4], %s360
      %s362 = sshll.u32 [#allocation8], 4
      %s363 = int_to_ptr.vmem [resolvable:$true] %s362
      %368 = dma.vmem_to_hbm [thread:$0]  %s363, 2048, %s3, [#allocation4], 64, 64, 4
    $region29: #{tpu_custom_call.1} parent=1 // pred_fallthru
      _
    // Predicated region
    $region30: #{tpu_custom_call.1} parent=1 // pred_check
      _
    $region31: #{tpu_custom_call.1} parent=1 // pred_check_branch
      %370 = sbr.rel (0) target = $region33
    $region32: #{tpu_custom_call.1} parent=1 // pred_region
      %371 = dma.done [#allocation4], 2048
    $region33: #{tpu_custom_call.1} parent=1 // pred_fallthru
      _
    %372 = vsyncpa [#allocation3], 1
    %373 = vsyncpa [#allocation6], 1
    %374 = vsyncpa [#allocation4], 1

</llo_original>
